<compile_context>
chip_gen: v7x
topology: tpu7x:2x2x1
jax: 0.10.0
libtpu: 0.0.40
codegen_flags: <defaults>
</compile_context>

<pallas_src>
import math

import numpy as np
import jax
import jax.numpy as jnp
from jax.experimental import pallas as pl
from jax.experimental.pallas import tpu as pltpu

# Small, self-consistent shapes (d_model divisible by num_heads).
BATCH = 2
SEQ = 8
D_MODEL = 64
NUM_HEADS = 4
D_K = D_MODEL // NUM_HEADS
BS = BATCH * SEQ                    # 16 token rows
BHS = BATCH * NUM_HEADS * SEQ       # 64 packed (b, h, k) score columns


def mha_kernel(x_ref, wqk_ref, bqk_ref, rep_ref, vhead_ref, bsum_ref,
               valid_ref, wo_ref, bo_ref, o_ref):
    """Fused MHA forward (one invocation, everything VMEM-resident).

    x_ref     : (B*S, 2D)     packed activations [q_flat | k_flat]
    wqk_ref   : (2D, 2D)      block-diag(Wq * 1/sqrt(d_k), Wk)
    bqk_ref   : (1, 2D)       [bq * 1/sqrt(d_k) | bk]
    rep_ref   : (B*H*S, B*S)  0/1 row-replication matrix (token row -> (b,h,k) row)
    vhead_ref : (B*H*S, D)    0/1 head-band mask for packed V rows
    bsum_ref  : (B*H*S, B*H*S) 0/1 same-(b,h)-block indicator (softmax denominators)
    valid_ref : (B*S, B*H*S)  0/1 same-batch mask (zeroes cross-batch garbage blocks)
    wo_ref    : (D, D)        output projection weight (plain, no kron)
    bo_ref    : (1, D)        output projection bias
    o_ref     : (B*S, D)      output, row = b*S + s (free reshape to (B,S,D))
    """
    # Fused Q/K projection: one lane-dense (16,128)@(128,128) MXU push.
    proj = jnp.dot(x_ref[...], wqk_ref[...],
                   preferred_element_type=jnp.float32) + bqk_ref[...]
    qp = proj[:, :D_MODEL]            # (B*S, D); 1/sqrt(d_k) already folded in
    kp = proj[:, D_MODEL:]            # (B*S, D)
    # Reference bug reproduced: value := key projection (w_v never reaches the output).

    # Block-packed V (== K): row index = b*H*S + h*S + k; only head-h's column band
    # is nonzero.  One (64,16)@(16,64) MXU push + one VALU mask multiply.
    v_pack = jnp.dot(rep_ref[...], kp,
                     preferred_element_type=jnp.float32) * vhead_ref[...]

    # All (b, h) score blocks in a single lane-dense (16,64)x(64,64) contraction.
    # s[b'*S+q, b*H*S+h*S+k] is a valid score only when b' == b; cross-batch columns
    # are garbage and are zeroed after the softmax.
    s = jnp.einsum('qd,kd->qk', qp, v_pack,
                   preferred_element_type=jnp.float32)

    # Mask is a semantic no-op in the reference (out-of-place masked_fill, result
    # discarded) -> intentionally not applied.

    # Per-(b, h, q) softmax over the key axis, block-wise on the packed layout.
    m = jnp.max(s, axis=-1, keepdims=True)      # shared row max: valid for stability
    e = jnp.exp(s - m)
    denom = jnp.dot(e, bsum_ref[...], preferred_element_type=jnp.float32)
    p = (e / denom) * valid_ref[...]            # exact divide; zero garbage blocks
    # TODO(synk): dropout on attention probabilities treated as identity (inference).

    # PV for every (b, h) in one (16,64)@(64,64) push; ctx lands directly in
    # (B*S, D) token-major / head-banded order -> no reassembly concats.
    ctx = jnp.dot(p, v_pack, preferred_element_type=jnp.float32)

    # Plain output projection (kron(I_B, Wo) removed per review).
    o_ref[...] = jnp.dot(ctx, wo_ref[...],
                         preferred_element_type=jnp.float32) + bo_ref[...]


def _block_diag2(a, b):
    za = jnp.zeros((a.shape[0], b.shape[1]), a.dtype)
    zb = jnp.zeros((b.shape[0], a.shape[1]), b.dtype)
    return jnp.concatenate(
        [jnp.concatenate([a, za], axis=1), jnp.concatenate([zb, b], axis=1)], axis=0)


def _packing_constants():
    """Shape-only 0/1 constants for the block-packed head layout (built once)."""
    rep = np.zeros((BHS, BS), np.float32)
    vhead = np.zeros((BHS, D_MODEL), np.float32)
    for b in range(BATCH):
        for h in range(NUM_HEADS):
            for k in range(SEQ):
                r = b * NUM_HEADS * SEQ + h * SEQ + k
                rep[r, b * SEQ + k] = 1.0
                vhead[r, h * D_K:(h + 1) * D_K] = 1.0
    bsum = np.kron(np.eye(BATCH * NUM_HEADS, dtype=np.float32),
                   np.ones((SEQ, SEQ), np.float32))
    valid = np.zeros((BS, BHS), np.float32)
    for b in range(BATCH):
        valid[b * SEQ:(b + 1) * SEQ,
              b * NUM_HEADS * SEQ:(b + 1) * NUM_HEADS * SEQ] = 1.0
    return (jnp.asarray(rep), jnp.asarray(vhead),
            jnp.asarray(bsum), jnp.asarray(valid))


def make_mha(params):
    """Pack weights & layout constants ONCE (params are static); return a jitted forward."""
    wq, bq, wk, bk, _wv, _bv, wo, bo = params   # w_v/b_v never reach the output (reference bug)
    scale = 1.0 / math.sqrt(D_K)

    # Hoisted out of the per-call path (review item 1).
    w_qk = _block_diag2(wq * scale, wk)                  # (2D, 2D)
    b_qk = jnp.concatenate([bq * scale, bk], axis=1)     # (1, 2D)
    rep, vhead, bsum, valid = _packing_constants()

    flops = 2 * (BS * (2 * D_MODEL) * (2 * D_MODEL)      # fused QK projection
                 + BHS * BS * D_MODEL                    # V block-pack replication
                 + BS * D_MODEL * BHS                    # packed scores
                 + BS * BHS * BHS                        # per-block softmax denominators
                 + BS * BHS * D_MODEL                    # packed PV
                 + BS * D_MODEL * D_MODEL)               # output projection
    bytes_accessed = 4 * (BS * 2 * D_MODEL               # x_pack
                          + (2 * D_MODEL) ** 2 + 2 * D_MODEL   # w_qk, b_qk
                          + BHS * BS + BHS * D_MODEL     # rep, vhead
                          + BHS * BHS + BS * BHS         # bsum, valid
                          + D_MODEL * D_MODEL + D_MODEL  # wo, bo
                          + BS * D_MODEL)                # output

    vmem_spec = pl.BlockSpec(memory_space=pltpu.MemorySpace.VMEM)
    mha_call = pl.pallas_call(
        mha_kernel,
        out_shape=jax.ShapeDtypeStruct((BS, D_MODEL), jnp.float32),
        in_specs=[vmem_spec] * 9,
        out_specs=vmem_spec,
        cost_estimate=pl.CostEstimate(flops=flops,
                                      transcendentals=BS * BHS,
                                      bytes_accessed=bytes_accessed),
    )

    @jax.jit
    def forward(q, k, v, mask):
        """q, k, v: [B, S, D] float32. v and mask ignored (reference bugs). Returns [B, S, D]."""
        del v, mask  # v is projected-then-discarded; mask's masked_fill result is discarded.
        x_pack = jnp.concatenate(
            [q.reshape(BS, D_MODEL), k.reshape(BS, D_MODEL)], axis=1)   # (B*S, 2D)
        out = mha_call(x_pack, w_qk, b_qk, rep, vhead, bsum, valid, wo, bo)
        return out.reshape(BATCH, SEQ, D_MODEL)   # free row-major reshape, no transpose

    return forward


def init_linear(key, d_in, d_out):
    """Deterministic nn.Linear-style init, weight stored as [in, out]."""
    k_w, k_b = jax.random.split(key)
    bound = 1.0 / math.sqrt(d_in)
    w = jax.random.uniform(k_w, (d_in, d_out), jnp.float32, -bound, bound)
    b = jax.random.uniform(k_b, (1, d_out), jnp.float32, -bound, bound)
    return w, b


def reference_mha(q, k, params):
    """Pure-JAX reference reproducing the (buggy) PyTorch forward semantics."""
    wq, bq, wk, bk, _wv, _bv, wo, bo = params
    B, S, D = q.shape
    qp = q @ wq + bq
    kp = k @ wk + bk
    vp = kp  # value overwritten by key projection in the reference
    qh = qp.reshape(B, S, NUM_HEADS, D_K).transpose(0, 2, 1, 3)
    kh = kp.reshape(B, S, NUM_HEADS, D_K).transpose(0, 2, 1, 3)
    vh = vp.reshape(B, S, NUM_HEADS, D_K).transpose(0, 2, 1, 3)
    s = jnp.einsum('bhqd,bhkd->bhqk', qh, kh) / math.sqrt(D_K)
    p = jax.nn.softmax(s, axis=-1)
    x = jnp.einsum('bhqk,bhkd->bhqd', p, vh)
    x = x.transpose(0, 2, 1, 3).reshape(B, S, D)
    return x @ wo + bo


if __name__ == "__main__":
    root = jax.random.PRNGKey(0)
    k_q, k_k, k_v, k_pq, k_pk, k_pv, k_po = jax.random.split(root, 7)

    q = jax.random.normal(k_q, (BATCH, SEQ, D_MODEL), jnp.float32)
    k = jax.random.normal(k_k, (BATCH, SEQ, D_MODEL), jnp.float32)
    v = jax.random.normal(k_v, (BATCH, SEQ, D_MODEL), jnp.float32)
    mask = jnp.ones((BATCH, 1, SEQ, SEQ), jnp.float32)  # semantic no-op, see notes

    wq, bq = init_linear(k_pq, D_MODEL, D_MODEL)
    wk, bk = init_linear(k_pk, D_MODEL, D_MODEL)
    wv, bv = init_linear(k_pv, D_MODEL, D_MODEL)  # initialized but unused (reference bug)
    wo, bo = init_linear(k_po, D_MODEL, D_MODEL)
    params = (wq, bq, wk, bk, wv, bv, wo, bo)

    mha = make_mha(params)          # weights packed once, outside the call path
    out = jax.block_until_ready(mha(q, k, v, mask))

    ref = reference_mha(q, k, params)
    assert out.shape == (BATCH, SEQ, D_MODEL)
    # Exact softmax divide (no approximate reciprocal) -> tight parity with the reference.
    assert jnp.allclose(out, ref, atol=1e-4, rtol=1e-4), "mismatch vs pure-JAX reference"

    print("KERNEL_OK")
</pallas_src>

<mosaic_0001>
module attributes {stable_mosaic.version = 11 : i64} {
  func.func @mha_kernel(%arg0: memref<16x128xf32, #tpu.memory_space<vmem>>, %arg1: memref<128x128xf32, #tpu.memory_space<vmem>>, %arg2: memref<1x128xf32, #tpu.memory_space<vmem>>, %arg3: memref<64x16xf32, #tpu.memory_space<vmem>>, %arg4: memref<64x64xf32, #tpu.memory_space<vmem>>, %arg5: memref<64x64xf32, #tpu.memory_space<vmem>>, %arg6: memref<16x64xf32, #tpu.memory_space<vmem>>, %arg7: memref<64x64xf32, #tpu.memory_space<vmem>>, %arg8: memref<1x64xf32, #tpu.memory_space<vmem>>, %arg9: memref<16x64xf32, #tpu.memory_space<vmem>>) attributes {dimension_semantics = [], scalar_prefetch = 0 : i64, scratch_operands = 0 : i64, tpu.core_type = #tpu.core_type<tc>} {
    %c0 = arith.constant 0 : index
    %c0_0 = arith.constant 0 : index
    %0 = vector.load %arg0[%c0, %c0_0] : memref<16x128xf32, #tpu.memory_space<vmem>>, vector<16x128xf32>
    %c0_1 = arith.constant 0 : index
    %c0_2 = arith.constant 0 : index
    %1 = vector.load %arg1[%c0_1, %c0_2] : memref<128x128xf32, #tpu.memory_space<vmem>>, vector<128x128xf32>
    %cst = arith.constant dense<0.000000e+00> : vector<16x128xf32>
    %2 = tpu.matmul %0, %1, %cst {dimension_numbers = #tpu.dot_dimension_numbers<[1], [0], [0], [1], [0, 0, 1, 1], [], []>} : vector<16x128xf32>, vector<128x128xf32>, vector<16x128xf32> -> vector<16x128xf32>
    %c0_3 = arith.constant 0 : index
    %c0_4 = arith.constant 0 : index
    %3 = vector.load %arg2[%c0_3, %c0_4] : memref<1x128xf32, #tpu.memory_space<vmem>>, vector<1x128xf32>
    %4 = vector.broadcast %3 : vector<1x128xf32> to vector<16x128xf32>
    %5 = arith.addf %2, %4 : vector<16x128xf32>
    %6 = vector.extract_strided_slice %5 {offsets = [0, 0], sizes = [16, 64], strides = [1, 1]} : vector<16x128xf32> to vector<16x64xf32>
    %7 = vector.extract_strided_slice %5 {offsets = [0, 64], sizes = [16, 64], strides = [1, 1]} : vector<16x128xf32> to vector<16x64xf32>
    %c0_5 = arith.constant 0 : index
    %c0_6 = arith.constant 0 : index
    %8 = vector.load %arg3[%c0_5, %c0_6] : memref<64x16xf32, #tpu.memory_space<vmem>>, vector<64x16xf32>
    %cst_7 = arith.constant dense<0.000000e+00> : vector<64x64xf32>
    %9 = tpu.matmul %8, %7, %cst_7 {dimension_numbers = #tpu.dot_dimension_numbers<[1], [0], [0], [1], [0, 0, 1, 1], [], []>} : vector<64x16xf32>, vector<16x64xf32>, vector<64x64xf32> -> vector<64x64xf32>
    %c0_8 = arith.constant 0 : index
    %c0_9 = arith.constant 0 : index
    %10 = vector.load %arg4[%c0_8, %c0_9] : memref<64x64xf32, #tpu.memory_space<vmem>>, vector<64x64xf32>
    %11 = arith.mulf %9, %10 : vector<64x64xf32>
    "tpu.trace_start"() <{level = 10 : i32, message = "qd,kd->qk"}> : () -> ()
    %cst_10 = arith.constant dense<0.000000e+00> : vector<16x64xf32>
    %12 = tpu.matmul %6, %11, %cst_10 {dimension_numbers = #tpu.dot_dimension_numbers<[1], [1], [0], [0], [0, 0, 1, 0], [], []>} : vector<16x64xf32>, vector<64x64xf32>, vector<16x64xf32> -> vector<16x64xf32>
    "tpu.trace_stop"() : () -> ()
    %cst_11 = arith.constant dense<0xFF800000> : vector<16xf32>
    %13 = vector.multi_reduction <maximumf>, %12, %cst_11 [1] : vector<16x64xf32> to vector<16xf32>
    %14 = vector.shape_cast %13 : vector<16xf32> to vector<16x1xf32>
    %15 = vector.broadcast %14 : vector<16x1xf32> to vector<16x64xf32>
    %16 = arith.subf %12, %15 : vector<16x64xf32>
    %17 = math.exp %16 : vector<16x64xf32>
    %c0_12 = arith.constant 0 : index
    %c0_13 = arith.constant 0 : index
    %18 = vector.load %arg5[%c0_12, %c0_13] : memref<64x64xf32, #tpu.memory_space<vmem>>, vector<64x64xf32>
    %cst_14 = arith.constant dense<0.000000e+00> : vector<16x64xf32>
    %19 = tpu.matmul %17, %18, %cst_14 {dimension_numbers = #tpu.dot_dimension_numbers<[1], [0], [0], [1], [0, 0, 1, 1], [], []>} : vector<16x64xf32>, vector<64x64xf32>, vector<16x64xf32> -> vector<16x64xf32>
    %20 = arith.divf %17, %19 : vector<16x64xf32>
    %c0_15 = arith.constant 0 : index
    %c0_16 = arith.constant 0 : index
    %21 = vector.load %arg6[%c0_15, %c0_16] : memref<16x64xf32, #tpu.memory_space<vmem>>, vector<16x64xf32>
    %22 = arith.mulf %20, %21 : vector<16x64xf32>
    %cst_17 = arith.constant dense<0.000000e+00> : vector<16x64xf32>
    %23 = tpu.matmul %22, %11, %cst_17 {dimension_numbers = #tpu.dot_dimension_numbers<[1], [0], [0], [1], [0, 0, 1, 1], [], []>} : vector<16x64xf32>, vector<64x64xf32>, vector<16x64xf32> -> vector<16x64xf32>
    %c0_18 = arith.constant 0 : index
    %c0_19 = arith.constant 0 : index
    %24 = vector.load %arg7[%c0_18, %c0_19] : memref<64x64xf32, #tpu.memory_space<vmem>>, vector<64x64xf32>
    %cst_20 = arith.constant dense<0.000000e+00> : vector<16x64xf32>
    %25 = tpu.matmul %23, %24, %cst_20 {dimension_numbers = #tpu.dot_dimension_numbers<[1], [0], [0], [1], [0, 0, 1, 1], [], []>} : vector<16x64xf32>, vector<64x64xf32>, vector<16x64xf32> -> vector<16x64xf32>
    %c0_21 = arith.constant 0 : index
    %c0_22 = arith.constant 0 : index
    %26 = vector.load %arg8[%c0_21, %c0_22] : memref<1x64xf32, #tpu.memory_space<vmem>>, vector<1x64xf32>
    %27 = vector.broadcast %26 : vector<1x64xf32> to vector<16x64xf32>
    %28 = arith.addf %25, %27 : vector<16x64xf32>
    %c0_23 = arith.constant 0 : index
    %c0_24 = arith.constant 0 : index
    %29 = vector.load %arg9[%c0_23, %c0_24] : memref<16x64xf32, #tpu.memory_space<vmem>>, vector<16x64xf32>
    tpu.vector_store %arg9[%c0_23, %c0_24], %28 {strides = array<i32>} : memref<16x64xf32, #tpu.memory_space<vmem>>, vector<16x64xf32>,
    return
  }
}

</mosaic_0001>

<llo_original>
// kernel: forward.1
$region0: #{forward.1}
  #allocation0 [shape = 'u32[]', space=smem, size = 0x4, offset = 0x4, fixed_abs, tag = 'smem constant byte address 0x4 - core index']
  #allocation1 [shape = 'u32[144,128]{1,0:T(1,128)}', space=vmem, size = 0x12000, scoped, tag = 'internal scratch']
  %s0 = inlined_call_operand.vmem [shape: f32[16,128], index: 0, kind: input, shape index: {}]
  %s1 = inlined_call_operand.hbm [shape: f32[128,128], index: 1, kind: input, shape index: {}]
  %s2 = inlined_call_operand.vmem [shape: f32[1,128], index: 2, kind: input, shape index: {}]
  %s3 = inlined_call_operand.hbm [shape: f32[64,16], index: 3, kind: input, shape index: {}]
  %s4 = inlined_call_operand.hbm [shape: f32[64,64], index: 4, kind: input, shape index: {}]
  %s5 = inlined_call_operand.hbm [shape: f32[64,64], index: 5, kind: input, shape index: {}]
  %s6 = inlined_call_operand.vmem [shape: f32[16,64], index: 6, kind: input, shape index: {}]
  %s7 = inlined_call_operand.vmem [shape: f32[64,64], index: 7, kind: input, shape index: {}]
  %s8 = inlined_call_operand.vmem [shape: f32[1,64], index: 8, kind: input, shape index: {}]
  %s9 = inlined_call_operand.hbm [shape: f32[16,64], index: 9, kind: output, shape index: {}]
  %s10 = sld [smem:[#allocation0]]
  $region62: #{forward.1} parent=0
    _
  %s12 = ssub.s32 1, %s10
  %s13 = scalar_select 0, %s12, %s10
  $region1: #{forward.1} parent=0
    #allocation2 [shape = 'u8[65536]{0}', space=vmem, size = 0x10000, scoped, tag = 'input window, operand 1, single buffered']
    #allocation3 [shape = 's32[1]{0}', space=sflag, size = 0x4, scoped, tag = 'scoped memory for forward.1']
    #allocation4 [shape = 's32[1]{0}', space=sflag, size = 0x4, scoped, tag = 'scoped memory for forward.1']
    #allocation5 [shape = 'u8[32768]{0}', space=vmem, size = 0x8000, scoped, tag = 'input window, operand 3, single buffered']
    #allocation6 [shape = 's32[1]{0}', space=sflag, size = 0x4, scoped, tag = 'scoped memory for forward.1']
    #allocation7 [shape = 'u8[32768]{0}', space=vmem, size = 0x8000, scoped, tag = 'input window, operand 4, single buffered']
    #allocation8 [shape = 'u8[32768]{0}', space=vmem, size = 0x8000, scoped, tag = 'input window, operand 5, single buffered']
    #allocation9 [shape = 's32[1]{0}', space=sflag, size = 0x4, scoped, tag = 'scoped memory for forward.1']
    #allocation10 [shape = 'u8[8192]{0}', space=vmem, size = 0x2000, scoped, tag = 'output window, operand 0, single buffered']
    %14 = vsyncpa [#allocation3], 0
    %15 = vsyncpa [#allocation6], 0
    %16 = vsyncpa [#allocation9], 0
    %17 = vsyncpa [#allocation4], 0
    // Predicated region
    $region2: #{forward.1} parent=1 // pred_check
      _
    $region3: #{forward.1} parent=1 // pred_check_branch
      %19 = sbr.rel (0) target = $region5
    $region4: #{forward.1} parent=1 // pred_region
      _
    $region5: #{forward.1} parent=1 // pred_fallthru
      _
    // Predicated region
    $region6: #{forward.1} parent=1 // pred_check
      _
    $region7: #{forward.1} parent=1 // pred_check_branch
      %21 = sbr.rel (0) target = $region9
    $region8: #{forward.1} parent=1 // pred_region
      %s23 = ssub.s32 2048, 2048
      %24 = vsyncadd [#allocation3], %s23
      %s25 = sshll.u32 [#allocation2], 4
      %s26 = int_to_ptr.vmem [resolvable:$true] %s25
      %31 = dma.hbm_to_vmem [thread:$0]  %s1, 2048, %s26, [#allocation3], 128, 128, 8
    $region9: #{forward.1} parent=1 // pred_fallthru
      _
    // Predicated region
    $region10: #{forward.1} parent=1 // pred_check
      _
    $region11: #{forward.1} parent=1 // pred_check_branch
      %33 = sbr.rel (0) target = $region13
    $region12: #{forward.1} parent=1 // pred_region
      _
    $region13: #{forward.1} parent=1 // pred_fallthru
      _
    // Predicated region
    $region14: #{forward.1} parent=1 // pred_check
      _
    $region15: #{forward.1} parent=1 // pred_check_branch
      %35 = sbr.rel (0) target = $region17
    $region16: #{forward.1} parent=1 // pred_region
      %s37 = ssub.s32 1024, 1024
      %38 = vsyncadd [#allocation6], %s37
      %s39 = sshll.u32 [#allocation5], 4
      %s40 = int_to_ptr.vmem [resolvable:$true] %s39
      %45 = dma.hbm_to_vmem [thread:$0]  %s3, 1024, %s40, [#allocation6], 128, 128, 8
    $region17: #{forward.1} parent=1 // pred_fallthru
      _
    // Predicated region
    $region18: #{forward.1} parent=1 // pred_check
      _
    $region19: #{forward.1} parent=1 // pred_check_branch
      %47 = sbr.rel (0) target = $region21
    $region20: #{forward.1} parent=1 // pred_region
      %s49 = ssub.s32 1024, 1024
      %50 = vsyncadd [#allocation6], %s49
      %s51 = sshll.u32 [#allocation7], 4
      %s52 = int_to_ptr.vmem [resolvable:$true] %s51
      %57 = dma.hbm_to_vmem [thread:$0]  %s4, 1024, %s52, [#allocation6], 128, 128, 8
    $region21: #{forward.1} parent=1 // pred_fallthru
      _
    // Predicated region
    $region22: #{forward.1} parent=1 // pred_check
      _
    $region23: #{forward.1} parent=1 // pred_check_branch
      %59 = sbr.rel (0) target = $region25
    $region24: #{forward.1} parent=1 // pred_region
      %s61 = ssub.s32 1024, 1024
      %62 = vsyncadd [#allocation9], %s61
      %s63 = sshll.u32 [#allocation8], 4
      %s64 = int_to_ptr.vmem [resolvable:$true] %s63
      %69 = dma.hbm_to_vmem [thread:$0]  %s5, 1024, %s64, [#allocation9], 128, 128, 8
    $region25: #{forward.1} parent=1 // pred_fallthru
      _
    // Predicated region
    $region26: #{forward.1} parent=1 // pred_check
      _
    $region27: #{forward.1} parent=1 // pred_check_branch
      %71 = sbr.rel (0) target = $region29
    $region28: #{forward.1} parent=1 // pred_region
      _
    $region29: #{forward.1} parent=1 // pred_fallthru
      _
    // Predicated region
    $region30: #{forward.1} parent=1 // pred_check
      _
    $region31: #{forward.1} parent=1 // pred_check_branch
      %73 = sbr.rel (0) target = $region33
    $region32: #{forward.1} parent=1 // pred_region
      _
    $region33: #{forward.1} parent=1 // pred_fallthru
      _
    // Predicated region
    $region34: #{forward.1} parent=1 // pred_check
      _
    $region35: #{forward.1} parent=1 // pred_check_branch
      %75 = sbr.rel (0) target = $region37
    $region36: #{forward.1} parent=1 // pred_region
      _
    $region37: #{forward.1} parent=1 // pred_fallthru
      _
    // Predicated region
    $region38: #{forward.1} parent=1 // pred_check
      _
    $region39: #{forward.1} parent=1 // pred_check_branch
      %77 = sbr.rel (0) target = $region41
    $region40: #{forward.1} parent=1 // pred_region
      %78 = dma.done [#allocation3], 2048
    $region41: #{forward.1} parent=1 // pred_fallthru
      _
    // Predicated region
    $region42: #{forward.1} parent=1 // pred_check
      _
    $region43: #{forward.1} parent=1 // pred_check_branch
      %80 = sbr.rel (0) target = $region45
    $region44: #{forward.1} parent=1 // pred_region
      %81 = dma.done [#allocation6], 1024
    $region45: #{forward.1} parent=1 // pred_fallthru
      _
    // Predicated region
    $region46: #{forward.1} parent=1 // pred_check
      _
    $region47: #{forward.1} parent=1 // pred_check_branch
      %83 = sbr.rel (0) target = $region49
    $region48: #{forward.1} parent=1 // pred_region
      %84 = dma.done [#allocation6], 1024
    $region49: #{forward.1} parent=1 // pred_fallthru
      _
    // Predicated region
    $region50: #{forward.1} parent=1 // pred_check
      _
    $region51: #{forward.1} parent=1 // pred_check_branch
      %86 = sbr.rel (0) target = $region53
    $region52: #{forward.1} parent=1 // pred_region
      %87 = dma.done [#allocation9], 1024
    $region53: #{forward.1} parent=1 // pred_fallthru
      _
    %v88 = vld [vmem:[%s0] sm:$0xff]
    %v89 = vld [vmem:[%s0 + $0x8] sm:$0xff]
    %v90 = vld [vmem:[#allocation2] sm:$0xff]
    %v91 = vld [vmem:[#allocation2 + $0x8] sm:$0xff]
    %v92 = vld [vmem:[#allocation2 + $0x10] sm:$0xff]
    %v93 = vld [vmem:[#allocation2 + $0x18] sm:$0xff]
    %v94 = vld [vmem:[#allocation2 + $0x20] sm:$0xff]
    %v95 = vld [vmem:[#allocation2 + $0x28] sm:$0xff]
    %v96 = vld [vmem:[#allocation2 + $0x30] sm:$0xff]
    %v97 = vld [vmem:[#allocation2 + $0x38] sm:$0xff]
    %v98 = vld [vmem:[#allocation2 + $0x40] sm:$0xff]
    %v99 = vld [vmem:[#allocation2 + $0x48] sm:$0xff]
    %v100 = vld [vmem:[#allocation2 + $0x50] sm:$0xff]
    %v101 = vld [vmem:[#allocation2 + $0x58] sm:$0xff]
    %v102 = vld [vmem:[#allocation2 + $0x60] sm:$0xff]
    %v103 = vld [vmem:[#allocation2 + $0x68] sm:$0xff]
    %v104 = vld [vmem:[#allocation2 + $0x70] sm:$0xff]
    %v105 = vld [vmem:[#allocation2 + $0x78] sm:$0xff]
    %v106 = vld [vmem:[%s2] sm:$0x1]
    %v108 = vlaneseq
    %v109 = vshrl.u32 %v108, 7
    %v110 = vsub.s32 0, %v109
    %v111 = vrot.slane %v106, %v110
    %113 = vmatprep.subr.mxu0 0.0
    %114 = vmatpush1.msra.mxu0 %v90
    %115 = vmatprep.subr.mxu0 0.0
    %116 = vmatpush1.msra.mxu0 %v91
    %117 = vmatprep.subr.mxu0 0.0
    %118 = vmatpush1.msra.mxu0 %v92
    %119 = vmatprep.subr.mxu0 0.0
    %120 = vmatpush1.msra.mxu0 %v93
    %121 = vmatprep.subr.mxu0 0.0
    %122 = vmatpush1.msra.mxu0 %v94
    %123 = vmatprep.subr.mxu0 0.0
    %124 = vmatpush1.msra.mxu0 %v95
    %125 = vmatprep.subr.mxu0 0.0
    %126 = vmatpush1.msra.mxu0 %v96
    %127 = vmatprep.subr.mxu0 0.0
    %128 = vmatpush1.msra.mxu0 %v97
    %129 = vmatprep.subr.mxu0 0.0
    %130 = vmatpush1.msra.mxu0 %v98
    %131 = vmatprep.subr.mxu0 0.0
    %132 = vmatpush1.msra.mxu0 %v99
    %133 = vmatprep.subr.mxu0 0.0
    %134 = vmatpush1.msra.mxu0 %v100
    %135 = vmatprep.subr.mxu0 0.0
    %136 = vmatpush1.msra.mxu0 %v101
    %137 = vmatprep.subr.mxu0 0.0
    %138 = vmatpush1.msra.mxu0 %v102
    %139 = vmatprep.subr.mxu0 0.0
    %140 = vmatpush1.msra.mxu0 %v103
    %141 = vmatprep.subr.mxu0 0.0
    %142 = vmatpush1.msra.mxu0 %v104
    %143 = vmatprep.subr.mxu0 0.0
    %144 = vmatpush1.msra.mxu0 %v105
    %145 = vmatprep.subr.mxu0 0.0
    %146 = vmatpush1.msra.mxu0 0.0
    %147 = vmatprep.subr.mxu0 0.0
    %148 = vmatpush1.msra.mxu0 0.0
    %149 = vmatprep.subr.mxu0 0.0
    %150 = vmatpush1.msra.mxu0 0.0
    %151 = vmatprep.subr.mxu0 0.0
    %152 = vmatpush1.msra.mxu0 0.0
    %153 = vmatprep.subr.mxu0 0.0
    %154 = vmatpush1.msra.mxu0 0.0
    %155 = vmatprep.subr.mxu0 0.0
    %156 = vmatpush1.msra.mxu0 0.0
    %157 = vmatprep.subr.mxu0 0.0
    %158 = vmatpush1.msra.mxu0 0.0
    %159 = vmatprep.subr.mxu0 0.0
    %160 = vmatpush1.msra.mxu0 0.0
    %161 = vmatprep.subr.mxu0 0.0
    %162 = vmatpush1.msra.mxu0 0.0
    %163 = vmatprep.subr.mxu0 0.0
    %164 = vmatpush1.msra.mxu0 0.0
    %165 = vmatprep.subr.mxu0 0.0
    %166 = vmatpush1.msra.mxu0 0.0
    %167 = vmatprep.subr.mxu0 0.0
    %168 = vmatpush1.msra.mxu0 0.0
    %169 = vmatprep.subr.mxu0 0.0
    %170 = vmatpush1.msra.mxu0 0.0
    %171 = vmatprep.subr.mxu0 0.0
    %172 = vmatpush1.msra.mxu0 0.0
    %173 = vmatprep.subr.mxu0 0.0
    %174 = vmatpush1.msra.mxu0 0.0
    %175 = vmatprep.subr.mxu0 0.0
    %176 = vmatpush1.msra.mxu0 0.0
    %177 = vmatprep.mubr.f32.mxu0 0.0
    %178 = vmatmul.mubr.f32.gmra.mrb[0].mxu0 %v88
    %v179 = vpop.f32.mrb[0].mxu0
    %v180 = vadd.f32 %v111, %v179
    %v181 = vpop.f32.mrb[0].mxu0
    %182 = vmatprep.mubr.f32.mxu0 0.0
    %183 = vmatmul.mubr.f32.gmra.mrb[0].mxu0 %v89
    %v184 = vpop.f32.mrb[0].mxu0
    %v185 = vadd.f32 %v111, %v184
    %v186 = vpop.f32.mrb[0].mxu0
    %187 = vdwg.mxu0
    %v188 = vld [vmem:[#allocation5] sm:$0xff]
    %v189 = vld [vmem:[#allocation5 + $0x8] sm:$0xff]
    %v190 = vld [vmem:[#allocation5 + $0x10] sm:$0xff]
    %v191 = vld [vmem:[#allocation5 + $0x18] sm:$0xff]
    %v192 = vld [vmem:[#allocation5 + $0x20] sm:$0xff]
    %v193 = vld [vmem:[#allocation5 + $0x28] sm:$0xff]
    %v194 = vld [vmem:[#allocation5 + $0x30] sm:$0xff]
    %v195 = vld [vmem:[#allocation5 + $0x38] sm:$0xff]
    %198 = vrot.lane.b32.xlu0 %v180, 64
    %v199 = vpop.permute.xlu0 %198
    %200 = vrot.lane.b32.xlu0 %v185, 64
    %v201 = vpop.permute.xlu0 %200
    %vm204 = vcmask 130048
    %v206 = vsel %vm204, %v188, 0
    %v209 = vsel %vm204, %v189, 0
    %v212 = vsel %vm204, %v190, 0
    %v215 = vsel %vm204, %v191, 0
    %v218 = vsel %vm204, %v192, 0
    %v221 = vsel %vm204, %v193, 0
    %v224 = vsel %vm204, %v194, 0
    %v227 = vsel %vm204, %v195, 0
    %229 = vmatprep.subr.mxu0 0.0
    %230 = vmatpush1.msra.mxu0 %v199
    %231 = vmatprep.subr.mxu0 0.0
    %232 = vmatpush1.msra.mxu0 %v201
    %233 = vmatprep.subr.mxu0 0.0
    %234 = vmatpush1.msra.mxu0 0.0
    %235 = vmatprep.subr.mxu0 0.0
    %236 = vmatpush1.msra.mxu0 0.0
    %237 = vmatprep.subr.mxu0 0.0
    %238 = vmatpush1.msra.mxu0 0.0
    %239 = vmatprep.subr.mxu0 0.0
    %240 = vmatpush1.msra.mxu0 0.0
    %241 = vmatprep.subr.mxu0 0.0
    %242 = vmatpush1.msra.mxu0 0.0
    %243 = vmatprep.subr.mxu0 0.0
    %244 = vmatpush1.msra.mxu0 0.0
    %245 = vmatprep.subr.mxu0 0.0
    %246 = vmatpush1.msra.mxu0 0.0
    %247 = vmatprep.subr.mxu0 0.0
    %248 = vmatpush1.msra.mxu0 0.0
    %249 = vmatprep.subr.mxu0 0.0
    %250 = vmatpush1.msra.mxu0 0.0
    %251 = vmatprep.subr.mxu0 0.0
    %252 = vmatpush1.msra.mxu0 0.0
    %253 = vmatprep.subr.mxu0 0.0
    %254 = vmatpush1.msra.mxu0 0.0
    %255 = vmatprep.subr.mxu0 0.0
    %256 = vmatpush1.msra.mxu0 0.0
    %257 = vmatprep.subr.mxu0 0.0
    %258 = vmatpush1.msra.mxu0 0.0
    %259 = vmatprep.subr.mxu0 0.0
    %260 = vmatpush1.msra.mxu0 0.0
    %261 = vmatprep.subr.mxu0 0.0
    %262 = vmatpush1.msra.mxu0 0.0
    %263 = vmatprep.subr.mxu0 0.0
    %264 = vmatpush1.msra.mxu0 0.0
    %265 = vmatprep.subr.mxu0 0.0
    %266 = vmatpush1.msra.mxu0 0.0
    %267 = vmatprep.subr.mxu0 0.0
    %268 = vmatpush1.msra.mxu0 0.0
    %269 = vmatprep.subr.mxu0 0.0
    %270 = vmatpush1.msra.mxu0 0.0
    %271 = vmatprep.subr.mxu0 0.0
    %272 = vmatpush1.msra.mxu0 0.0
    %273 = vmatprep.subr.mxu0 0.0
    %274 = vmatpush1.msra.mxu0 0.0
    %275 = vmatprep.subr.mxu0 0.0
    %276 = vmatpush1.msra.mxu0 0.0
    %277 = vmatprep.subr.mxu0 0.0
    %278 = vmatpush1.msra.mxu0 0.0
    %279 = vmatprep.subr.mxu0 0.0
    %280 = vmatpush1.msra.mxu0 0.0
    %281 = vmatprep.subr.mxu0 0.0
    %282 = vmatpush1.msra.mxu0 0.0
    %283 = vmatprep.subr.mxu0 0.0
    %284 = vmatpush1.msra.mxu0 0.0
    %285 = vmatprep.subr.mxu0 0.0
    %286 = vmatpush1.msra.mxu0 0.0
    %287 = vmatprep.subr.mxu0 0.0
    %288 = vmatpush1.msra.mxu0 0.0
    %289 = vmatprep.subr.mxu0 0.0
    %290 = vmatpush1.msra.mxu0 0.0
    %291 = vmatprep.subr.mxu0 0.0
    %292 = vmatpush1.msra.mxu0 0.0
    %293 = vmatprep.mubr.f32.mxu0 0.0
    %294 = vmatmul.mubr.f32.gmra.mrb[0].mxu0 %v206
    %v295 = vpop.f32.mrb[0].mxu0
    %v296 = vadd.f32 0.0, %v295
    %v297 = vpop.f32.mrb[0].mxu0
    %298 = vmatprep.mubr.f32.mxu0 0.0
    %299 = vmatmul.mubr.f32.gmra.mrb[0].mxu0 %v209
    %v300 = vpop.f32.mrb[0].mxu0
    %v301 = vadd.f32 0.0, %v300
    %v302 = vpop.f32.mrb[0].mxu0
    %303 = vmatprep.mubr.f32.mxu0 0.0
    %304 = vmatmul.mubr.f32.gmra.mrb[0].mxu0 %v212
    %v305 = vpop.f32.mrb[0].mxu0
    %v306 = vadd.f32 0.0, %v305
    %v307 = vpop.f32.mrb[0].mxu0
    %308 = vmatprep.mubr.f32.mxu0 0.0
    %309 = vmatmul.mubr.f32.gmra.mrb[0].mxu0 %v215
    %v310 = vpop.f32.mrb[0].mxu0
    %v311 = vadd.f32 0.0, %v310
    %v312 = vpop.f32.mrb[0].mxu0
    %313 = vmatprep.mubr.f32.mxu0 0.0
    %314 = vmatmul.mubr.f32.gmra.mrb[0].mxu0 %v218
    %v315 = vpop.f32.mrb[0].mxu0
    %v316 = vadd.f32 0.0, %v315
    %v317 = vpop.f32.mrb[0].mxu0
    %318 = vmatprep.mubr.f32.mxu0 0.0
    %319 = vmatmul.mubr.f32.gmra.mrb[0].mxu0 %v221
    %v320 = vpop.f32.mrb[0].mxu0
    %v321 = vadd.f32 0.0, %v320
    %v322 = vpop.f32.mrb[0].mxu0
    %323 = vmatprep.mubr.f32.mxu0 0.0
    %324 = vmatmul.mubr.f32.gmra.mrb[0].mxu0 %v224
    %v325 = vpop.f32.mrb[0].mxu0
    %v326 = vadd.f32 0.0, %v325
    %v327 = vpop.f32.mrb[0].mxu0
    %328 = vmatprep.mubr.f32.mxu0 0.0
    %329 = vmatmul.mubr.f32.gmra.mrb[0].mxu0 %v227
    %v330 = vpop.f32.mrb[0].mxu0
    %v331 = vadd.f32 0.0, %v330
    %v332 = vpop.f32.mrb[0].mxu0
    %333 = vdwg.mxu0
    %v334 = vld [vmem:[#allocation7] sm:$0xff]
    %v335 = vld [vmem:[#allocation7 + $0x8] sm:$0xff]
    %v336 = vld [vmem:[#allocation7 + $0x10] sm:$0xff]
    %v337 = vld [vmem:[#allocation7 + $0x18] sm:$0xff]
    %v338 = vld [vmem:[#allocation7 + $0x20] sm:$0xff]
    %v339 = vld [vmem:[#allocation7 + $0x28] sm:$0xff]
    %v340 = vld [vmem:[#allocation7 + $0x30] sm:$0xff]
    %v341 = vld [vmem:[#allocation7 + $0x38] sm:$0xff]
    %v342 = vmul.f32 %v296, %v334
    %v343 = vmul.f32 %v301, %v335
    %v344 = vmul.f32 %v306, %v336
    %v345 = vmul.f32 %v311, %v337
    %v346 = vmul.f32 %v316, %v338
    %v347 = vmul.f32 %v321, %v339
    %v348 = vmul.f32 %v326, %v340
    %v349 = vmul.f32 %v331, %v341
    %vm350 = vcmask 523264
    %v351 = vsel %vm350, %v180, 0
    %v353 = vsel %vm350, %v185, 0
    %v356 = vsel %vm350, %v342, 0
    %v359 = vsel %vm350, %v343, 0
    %v362 = vsel %vm350, %v344, 0
    %v365 = vsel %vm350, %v345, 0
    %v368 = vsel %vm350, %v346, 0
    %v371 = vsel %vm350, %v347, 0
    %v374 = vsel %vm350, %v348, 0
    %v377 = vsel %vm350, %v349, 0
    %379 = vmatprep.subr.mxu0 0.0
    %380 = vmatpush1.xpose.msra.mxu0 %v356
    %381 = vmatprep.subr.mxu0 0.0
    %382 = vmatpush1.xpose.msra.mxu0 %v359
    %383 = vmatprep.subr.mxu0 0.0
    %384 = vmatpush1.xpose.msra.mxu0 %v362
    %385 = vmatprep.subr.mxu0 0.0
    %386 = vmatpush1.xpose.msra.mxu0 %v365
    %387 = vmatprep.subr.mxu0 0.0
    %388 = vmatpush1.xpose.msra.mxu0 %v368
    %389 = vmatprep.subr.mxu0 0.0
    %390 = vmatpush1.xpose.msra.mxu0 %v371
    %391 = vmatprep.subr.mxu0 0.0
    %392 = vmatpush1.xpose.msra.mxu0 %v374
    %393 = vmatprep.subr.mxu0 0.0
    %394 = vmatpush1.xpose.msra.mxu0 %v377
    %395 = vmatprep.subr.mxu0 0.0
    %396 = vmatpush1.xpose.msra.mxu0 0.0
    %397 = vmatprep.subr.mxu0 0.0
    %398 = vmatpush1.xpose.msra.mxu0 0.0
    %399 = vmatprep.subr.mxu0 0.0
    %400 = vmatpush1.xpose.msra.mxu0 0.0
    %401 = vmatprep.subr.mxu0 0.0
    %402 = vmatpush1.xpose.msra.mxu0 0.0
    %403 = vmatprep.subr.mxu0 0.0
    %404 = vmatpush1.xpose.msra.mxu0 0.0
    %405 = vmatprep.subr.mxu0 0.0
    %406 = vmatpush1.xpose.msra.mxu0 0.0
    %407 = vmatprep.subr.mxu0 0.0
    %408 = vmatpush1.xpose.msra.mxu0 0.0
    %409 = vmatprep.subr.mxu0 0.0
    %410 = vmatpush1.xpose.msra.mxu0 0.0
    %411 = vmatprep.subr.mxu0 0.0
    %412 = vmatpush1.xpose.msra.mxu0 0.0
    %413 = vmatprep.subr.mxu0 0.0
    %414 = vmatpush1.xpose.msra.mxu0 0.0
    %415 = vmatprep.subr.mxu0 0.0
    %416 = vmatpush1.xpose.msra.mxu0 0.0
    %417 = vmatprep.subr.mxu0 0.0
    %418 = vmatpush1.xpose.msra.mxu0 0.0
    %419 = vmatprep.subr.mxu0 0.0
    %420 = vmatpush1.xpose.msra.mxu0 0.0
    %421 = vmatprep.subr.mxu0 0.0
    %422 = vmatpush1.xpose.msra.mxu0 0.0
    %423 = vmatprep.subr.mxu0 0.0
    %424 = vmatpush1.xpose.msra.mxu0 0.0
    %425 = vmatprep.subr.mxu0 0.0
    %426 = vmatpush1.xpose.msra.mxu0 0.0
    %427 = vmatprep.subr.mxu0 0.0
    %428 = vmatpush1.xpose.msra.mxu0 0.0
    %429 = vmatprep.subr.mxu0 0.0
    %430 = vmatpush1.xpose.msra.mxu0 0.0
    %431 = vmatprep.subr.mxu0 0.0
    %432 = vmatpush1.xpose.msra.mxu0 0.0
    %433 = vmatprep.subr.mxu0 0.0
    %434 = vmatpush1.xpose.msra.mxu0 0.0
    %435 = vmatprep.subr.mxu0 0.0
    %436 = vmatpush1.xpose.msra.mxu0 0.0
    %437 = vmatprep.subr.mxu0 0.0
    %438 = vmatpush1.xpose.msra.mxu0 0.0
    %439 = vmatprep.subr.mxu0 0.0
    %440 = vmatpush1.xpose.msra.mxu0 0.0
    %441 = vmatprep.subr.mxu0 0.0
    %442 = vmatpush1.xpose.msra.mxu0 0.0
    %443 = vmatprep.mubr.f32.mxu0 0.0
    %444 = vmatmul.mubr.f32.gmra.mrb[0].mxu0 %v351
    %v445 = vpop.f32.mrb[0].mxu0
    %v446 = vadd.f32 0.0, %v445
    %v447 = vpop.f32.mrb[0].mxu0
    %448 = vmatprep.mubr.f32.mxu0 0.0
    %449 = vmatmul.mubr.f32.gmra.mrb[0].mxu0 %v353
    %v450 = vpop.f32.mrb[0].mxu0
    %v451 = vadd.f32 0.0, %v450
    %v452 = vpop.f32.mrb[0].mxu0
    %453 = vdwg.mxu0
    %v454 = vsel %vm350, %v446, -inf
    %455 = vmax.xlane.f32.xlu0 %v454
    %v456 = vpop.xlane.xlu0 %455
    %v457 = vsel %vm350, %v451, -inf
    %458 = vmax.xlane.f32.xlu0 %v457
    %v459 = vpop.xlane.xlu0 %458
    %v460 = vsub.f32 %v446, %v456
    %v461 = vsub.f32 %v451, %v459
    %v462 = vmul.f32 %v460, 1.442695
    %v463 = vpow.pop %v462
    %v464 = vmul.f32 %v461, 1.442695
    %v465 = vpow.pop %v464
    %v466 = vld [vmem:[#allocation8] sm:$0xff]
    %v467 = vld [vmem:[#allocation8 + $0x8] sm:$0xff]
    %v468 = vld [vmem:[#allocation8 + $0x10] sm:$0xff]
    %v469 = vld [vmem:[#allocation8 + $0x18] sm:$0xff]
    %v470 = vld [vmem:[#allocation8 + $0x20] sm:$0xff]
    %v471 = vld [vmem:[#allocation8 + $0x28] sm:$0xff]
    %v472 = vld [vmem:[#allocation8 + $0x30] sm:$0xff]
    %v473 = vld [vmem:[#allocation8 + $0x38] sm:$0xff]
    %v475 = vsel %vm350, %v463, 0
    %v478 = vsel %vm350, %v465, 0
    %480 = vmatprep.subr.mxu0 0.0
    %481 = vmatpush1.msra.mxu0 %v466
    %482 = vmatprep.subr.mxu0 0.0
    %483 = vmatpush1.msra.mxu0 %v467
    %484 = vmatprep.subr.mxu0 0.0
    %485 = vmatpush1.msra.mxu0 %v468
    %486 = vmatprep.subr.mxu0 0.0
    %487 = vmatpush1.msra.mxu0 %v469
    %488 = vmatprep.subr.mxu0 0.0
    %489 = vmatpush1.msra.mxu0 %v470
    %490 = vmatprep.subr.mxu0 0.0
    %491 = vmatpush1.msra.mxu0 %v471
    %492 = vmatprep.subr.mxu0 0.0
    %493 = vmatpush1.msra.mxu0 %v472
    %494 = vmatprep.subr.mxu0 0.0
    %495 = vmatpush1.msra.mxu0 %v473
    %496 = vmatprep.subr.mxu0 0.0
    %497 = vmatpush1.msra.mxu0 0.0
    %498 = vmatprep.subr.mxu0 0.0
    %499 = vmatpush1.msra.mxu0 0.0
    %500 = vmatprep.subr.mxu0 0.0
    %501 = vmatpush1.msra.mxu0 0.0
    %502 = vmatprep.subr.mxu0 0.0
    %503 = vmatpush1.msra.mxu0 0.0
    %504 = vmatprep.subr.mxu0 0.0
    %505 = vmatpush1.msra.mxu0 0.0
    %506 = vmatprep.subr.mxu0 0.0
    %507 = vmatpush1.msra.mxu0 0.0
    %508 = vmatprep.subr.mxu0 0.0
    %509 = vmatpush1.msra.mxu0 0.0
    %510 = vmatprep.subr.mxu0 0.0
    %511 = vmatpush1.msra.mxu0 0.0
    %512 = vmatprep.subr.mxu0 0.0
    %513 = vmatpush1.msra.mxu0 0.0
    %514 = vmatprep.subr.mxu0 0.0
    %515 = vmatpush1.msra.mxu0 0.0
    %516 = vmatprep.subr.mxu0 0.0
    %517 = vmatpush1.msra.mxu0 0.0
    %518 = vmatprep.subr.mxu0 0.0
    %519 = vmatpush1.msra.mxu0 0.0
    %520 = vmatprep.subr.mxu0 0.0
    %521 = vmatpush1.msra.mxu0 0.0
    %522 = vmatprep.subr.mxu0 0.0
    %523 = vmatpush1.msra.mxu0 0.0
    %524 = vmatprep.subr.mxu0 0.0
    %525 = vmatpush1.msra.mxu0 0.0
    %526 = vmatprep.subr.mxu0 0.0
    %527 = vmatpush1.msra.mxu0 0.0
    %528 = vmatprep.subr.mxu0 0.0
    %529 = vmatpush1.msra.mxu0 0.0
    %530 = vmatprep.subr.mxu0 0.0
    %531 = vmatpush1.msra.mxu0 0.0
    %532 = vmatprep.subr.mxu0 0.0
    %533 = vmatpush1.msra.mxu0 0.0
    %534 = vmatprep.subr.mxu0 0.0
    %535 = vmatpush1.msra.mxu0 0.0
    %536 = vmatprep.subr.mxu0 0.0
    %537 = vmatpush1.msra.mxu0 0.0
    %538 = vmatprep.subr.mxu0 0.0
    %539 = vmatpush1.msra.mxu0 0.0
    %540 = vmatprep.subr.mxu0 0.0
    %541 = vmatpush1.msra.mxu0 0.0
    %542 = vmatprep.subr.mxu0 0.0
    %543 = vmatpush1.msra.mxu0 0.0
    %544 = vmatprep.mubr.f32.mxu0 0.0
    %545 = vmatmul.mubr.f32.gmra.mrb[0].mxu0 %v475
    %v546 = vpop.f32.mrb[0].mxu0
    %v547 = vadd.f32 0.0, %v546
    %v548 = vpop.f32.mrb[0].mxu0
    %549 = vmatprep.mubr.f32.mxu0 0.0
    %550 = vmatmul.mubr.f32.gmra.mrb[0].mxu0 %v478
    %v551 = vpop.f32.mrb[0].mxu0
    %v552 = vadd.f32 0.0, %v551
    %v553 = vpop.f32.mrb[0].mxu0
    %554 = vdwg.mxu0
    %v555 = vrcp.pop %v547
    %v556 = vmul.f32 %v463, %v555
    %v557 = vrcp.pop %v552
    %v558 = vmul.f32 %v465, %v557
    %v559 = vld [vmem:[%s6] sm:$0xff]
    %v560 = vld [vmem:[%s6 + $0x8] sm:$0xff]
    %v561 = vmul.f32 %v556, %v559
    %v562 = vmul.f32 %v558, %v560
    %v564 = vsel %vm350, %v561, 0
    %v567 = vsel %vm350, %v562, 0
    %569 = vmatprep.subr.mxu0 0.0
    %570 = vmatpush1.msra.mxu0 %v342
    %571 = vmatprep.subr.mxu0 0.0
    %572 = vmatpush1.msra.mxu0 %v343
    %573 = vmatprep.subr.mxu0 0.0
    %574 = vmatpush1.msra.mxu0 %v344
    %575 = vmatprep.subr.mxu0 0.0
    %576 = vmatpush1.msra.mxu0 %v345
    %577 = vmatprep.subr.mxu0 0.0
    %578 = vmatpush1.msra.mxu0 %v346
    %579 = vmatprep.subr.mxu0 0.0
    %580 = vmatpush1.msra.mxu0 %v347
    %581 = vmatprep.subr.mxu0 0.0
    %582 = vmatpush1.msra.mxu0 %v348
    %583 = vmatprep.subr.mxu0 0.0
    %584 = vmatpush1.msra.mxu0 %v349
    %585 = vmatprep.subr.mxu0 0.0
    %586 = vmatpush1.msra.mxu0 0.0
    %587 = vmatprep.subr.mxu0 0.0
    %588 = vmatpush1.msra.mxu0 0.0
    %589 = vmatprep.subr.mxu0 0.0
    %590 = vmatpush1.msra.mxu0 0.0
    %591 = vmatprep.subr.mxu0 0.0
    %592 = vmatpush1.msra.mxu0 0.0
    %593 = vmatprep.subr.mxu0 0.0
    %594 = vmatpush1.msra.mxu0 0.0
    %595 = vmatprep.subr.mxu0 0.0
    %596 = vmatpush1.msra.mxu0 0.0
    %597 = vmatprep.subr.mxu0 0.0
    %598 = vmatpush1.msra.mxu0 0.0
    %599 = vmatprep.subr.mxu0 0.0
    %600 = vmatpush1.msra.mxu0 0.0
    %601 = vmatprep.subr.mxu0 0.0
    %602 = vmatpush1.msra.mxu0 0.0
    %603 = vmatprep.subr.mxu0 0.0
    %604 = vmatpush1.msra.mxu0 0.0
    %605 = vmatprep.subr.mxu0 0.0
    %606 = vmatpush1.msra.mxu0 0.0
    %607 = vmatprep.subr.mxu0 0.0
    %608 = vmatpush1.msra.mxu0 0.0
    %609 = vmatprep.subr.mxu0 0.0
    %610 = vmatpush1.msra.mxu0 0.0
    %611 = vmatprep.subr.mxu0 0.0
    %612 = vmatpush1.msra.mxu0 0.0
    %613 = vmatprep.subr.mxu0 0.0
    %614 = vmatpush1.msra.mxu0 0.0
    %615 = vmatprep.subr.mxu0 0.0
    %616 = vmatpush1.msra.mxu0 0.0
    %617 = vmatprep.subr.mxu0 0.0
    %618 = vmatpush1.msra.mxu0 0.0
    %619 = vmatprep.subr.mxu0 0.0
    %620 = vmatpush1.msra.mxu0 0.0
    %621 = vmatprep.subr.mxu0 0.0
    %622 = vmatpush1.msra.mxu0 0.0
    %623 = vmatprep.subr.mxu0 0.0
    %624 = vmatpush1.msra.mxu0 0.0
    %625 = vmatprep.subr.mxu0 0.0
    %626 = vmatpush1.msra.mxu0 0.0
    %627 = vmatprep.subr.mxu0 0.0
    %628 = vmatpush1.msra.mxu0 0.0
    %629 = vmatprep.subr.mxu0 0.0
    %630 = vmatpush1.msra.mxu0 0.0
    %631 = vmatprep.subr.mxu0 0.0
    %632 = vmatpush1.msra.mxu0 0.0
    %633 = vmatprep.mubr.f32.mxu0 0.0
    %634 = vmatmul.mubr.f32.gmra.mrb[0].mxu0 %v564
    %v635 = vpop.f32.mrb[0].mxu0
    %v636 = vadd.f32 0.0, %v635
    %v637 = vpop.f32.mrb[0].mxu0
    %638 = vmatprep.mubr.f32.mxu0 0.0
    %639 = vmatmul.mubr.f32.gmra.mrb[0].mxu0 %v567
    %v640 = vpop.f32.mrb[0].mxu0
    %v641 = vadd.f32 0.0, %v640
    %v642 = vpop.f32.mrb[0].mxu0
    %643 = vdwg.mxu0
    %v644 = vld [vmem:[%s7] sm:$0xff]
    %v645 = vld [vmem:[%s7 + $0x8] sm:$0xff]
    %v646 = vld [vmem:[%s7 + $0x10] sm:$0xff]
    %v647 = vld [vmem:[%s7 + $0x18] sm:$0xff]
    %v648 = vld [vmem:[%s7 + $0x20] sm:$0xff]
    %v649 = vld [vmem:[%s7 + $0x28] sm:$0xff]
    %v650 = vld [vmem:[%s7 + $0x30] sm:$0xff]
    %v651 = vld [vmem:[%s7 + $0x38] sm:$0xff]
    %v652 = vld [vmem:[%s8] sm:$0x1]
    %v654 = vlaneseq
    %v655 = vshrl.u32 %v654, 7
    %v656 = vsub.s32 0, %v655
    %v657 = vrot.slane %v652, %v656
    %v660 = vsel %vm350, %v636, 0
    %v663 = vsel %vm350, %v641, 0
    %665 = vmatprep.subr.mxu0 0.0
    %666 = vmatpush1.msra.mxu0 %v644
    %667 = vmatprep.subr.mxu0 0.0
    %668 = vmatpush1.msra.mxu0 %v645
    %669 = vmatprep.subr.mxu0 0.0
    %670 = vmatpush1.msra.mxu0 %v646
    %671 = vmatprep.subr.mxu0 0.0
    %672 = vmatpush1.msra.mxu0 %v647
    %673 = vmatprep.subr.mxu0 0.0
    %674 = vmatpush1.msra.mxu0 %v648
    %675 = vmatprep.subr.mxu0 0.0
    %676 = vmatpush1.msra.mxu0 %v649
    %677 = vmatprep.subr.mxu0 0.0
    %678 = vmatpush1.msra.mxu0 %v650
    %679 = vmatprep.subr.mxu0 0.0
    %680 = vmatpush1.msra.mxu0 %v651
    %681 = vmatprep.subr.mxu0 0.0
    %682 = vmatpush1.msra.mxu0 0.0
    %683 = vmatprep.subr.mxu0 0.0
    %684 = vmatpush1.msra.mxu0 0.0
    %685 = vmatprep.subr.mxu0 0.0
    %686 = vmatpush1.msra.mxu0 0.0
    %687 = vmatprep.subr.mxu0 0.0
    %688 = vmatpush1.msra.mxu0 0.0
    %689 = vmatprep.subr.mxu0 0.0
    %690 = vmatpush1.msra.mxu0 0.0
    %691 = vmatprep.subr.mxu0 0.0
    %692 = vmatpush1.msra.mxu0 0.0
    %693 = vmatprep.subr.mxu0 0.0
    %694 = vmatpush1.msra.mxu0 0.0
    %695 = vmatprep.subr.mxu0 0.0
    %696 = vmatpush1.msra.mxu0 0.0
    %697 = vmatprep.subr.mxu0 0.0
    %698 = vmatpush1.msra.mxu0 0.0
    %699 = vmatprep.subr.mxu0 0.0
    %700 = vmatpush1.msra.mxu0 0.0
    %701 = vmatprep.subr.mxu0 0.0
    %702 = vmatpush1.msra.mxu0 0.0
    %703 = vmatprep.subr.mxu0 0.0
    %704 = vmatpush1.msra.mxu0 0.0
    %705 = vmatprep.subr.mxu0 0.0
    %706 = vmatpush1.msra.mxu0 0.0
    %707 = vmatprep.subr.mxu0 0.0
    %708 = vmatpush1.msra.mxu0 0.0
    %709 = vmatprep.subr.mxu0 0.0
    %710 = vmatpush1.msra.mxu0 0.0
    %711 = vmatprep.subr.mxu0 0.0
    %712 = vmatpush1.msra.mxu0 0.0
    %713 = vmatprep.subr.mxu0 0.0
    %714 = vmatpush1.msra.mxu0 0.0
    %715 = vmatprep.subr.mxu0 0.0
    %716 = vmatpush1.msra.mxu0 0.0
    %717 = vmatprep.subr.mxu0 0.0
    %718 = vmatpush1.msra.mxu0 0.0
    %719 = vmatprep.subr.mxu0 0.0
    %720 = vmatpush1.msra.mxu0 0.0
    %721 = vmatprep.subr.mxu0 0.0
    %722 = vmatpush1.msra.mxu0 0.0
    %723 = vmatprep.subr.mxu0 0.0
    %724 = vmatpush1.msra.mxu0 0.0
    %725 = vmatprep.subr.mxu0 0.0
    %726 = vmatpush1.msra.mxu0 0.0
    %727 = vmatprep.subr.mxu0 0.0
    %728 = vmatpush1.msra.mxu0 0.0
    %729 = vmatprep.mubr.f32.mxu0 0.0
    %730 = vmatmul.mubr.f32.gmra.mrb[0].mxu0 %v660
    %v731 = vpop.f32.mrb[0].mxu0
    %v732 = vadd.f32 %v657, %v731
    %v733 = vpop.f32.mrb[0].mxu0
    %734 = vmatprep.mubr.f32.mxu0 0.0
    %735 = vmatmul.mubr.f32.gmra.mrb[0].mxu0 %v663
    %v736 = vpop.f32.mrb[0].mxu0
    %v737 = vadd.f32 %v657, %v736
    %v738 = vpop.f32.mrb[0].mxu0
    %739 = vdwg.mxu0
    %740 = vst.msk [vmem:[#allocation10] sm:$0xff] %vm350, %v732
    %741 = vst.msk [vmem:[#allocation10 + $0x8] sm:$0xff] %vm350, %v737
    // Predicated region
    $region54: #{forward.1} parent=1 // pred_check
      _
    $region55: #{forward.1} parent=1 // pred_check_branch
      %743 = sbr.rel (0) target = $region57
    $region56: #{forward.1} parent=1 // pred_region
      %s745 = ssub.s32 256, 256
      %746 = vsyncadd [#allocation4], %s745
      %s747 = sshll.u32 [#allocation10], 4
      %s748 = int_to_ptr.vmem [resolvable:$true] %s747
      %753 = dma.vmem_to_hbm [thread:$0]  %s748, 256, %s9, [#allocation4], 128, 128, 8
    $region57: #{forward.1} parent=1 // pred_fallthru
      _
    // Predicated region
    $region58: #{forward.1} parent=1 // pred_check
      _
    $region59: #{forward.1} parent=1 // pred_check_branch
      %755 = sbr.rel (0) target = $region61
    $region60: #{forward.1} parent=1 // pred_region
      %756 = dma.done [#allocation4], 256
    $region61: #{forward.1} parent=1 // pred_fallthru
      _
    %757 = vsyncpa [#allocation3], 1
    %758 = vsyncpa [#allocation6], 1
    %759 = vsyncpa [#allocation9], 1
    %760 = vsyncpa [#allocation4], 1

</llo_original>
